<compile_context>
chip_gen: v7x
topology: tpu7x:2x2x1
jax: 0.10.0
libtpu: 0.0.40
codegen_flags: <defaults>
</compile_context>

<pallas_src>
import functools

import jax
import jax.numpy as jnp
import numpy as np
from jax.experimental import pallas as pl
from jax.experimental.pallas import tpu as pltpu


def _round_up(x, m):
    return ((x + m - 1) // m) * m


def _multi_aggr_kernel(
    cnt_ref,    # [Bp, 1]  f32  per-graph node counts (constant block)
    batch_ref,  # [TN, 1]  i32  graph id per node (-1 for padding)
    x_ref,      # [TN, TF] f32  node-feature tile
    mean_ref,   # [Bp, TF] f32  outputs (written once, at the last node step)
    max_ref,    # [Bp, TF] f32
    min_ref,    # [Bp, TF] f32
    sum_s,      # [Bp, TF] f32  VMEM-resident accumulators
    max_s,      # [Bp, TF] f32
    min_s,      # [Bp, TF] f32
    *, num_graphs, b_pad,
):
    i = pl.program_id(1)                       # node (reduction) axis, fastest

    @pl.when(i == 0)
    def _init():
        sum_s[...] = jnp.zeros_like(sum_s)
        max_s[...] = jnp.full_like(max_s, -jnp.inf)
        min_s[...] = jnp.full_like(min_s, jnp.inf)

    xb = x_ref[...]                            # [TN, TF]
    bcol = batch_ref[...]                      # [TN, 1] -> broadcasts over lanes
    tn, tf = xb.shape

    # ---- segment sum on the MXU: build the one-hot in-kernel and contract the
    # node axis directly (oh^T @ x, no HBM one-hot, no physical transpose). ---
    gids = jax.lax.broadcasted_iota(jnp.int32, (tn, b_pad), 1)
    oh = (bcol == gids).astype(jnp.float32)    # [TN, Bp]
    sum_s[...] += jax.lax.dot_general(
        oh, xb, (((0,), (0,)), ((), ())),
        preferred_element_type=jnp.float32)    # [Bp, TF]

    # ---- segment max / min: per-graph masked reductions, then ONE full-block
    # accumulator update per tile (no per-row scratch read-modify-writes). ----
    # TODO(synk): for large num_graphs (>~32) switch to lax.fori_loop with a
    # lane-chunked masked reduce to avoid unroll blowup / vreg spills.
    rows_max, rows_min = [], []
    for b in range(num_graphs):
        m = bcol == b                          # [TN, 1]
        rows_max.append(jnp.max(jnp.where(m, xb, -jnp.inf), axis=0, keepdims=True))
        rows_min.append(jnp.min(jnp.where(m, xb, jnp.inf), axis=0, keepdims=True))
    if b_pad > num_graphs:
        fill = jnp.full((b_pad - num_graphs, tf), jnp.inf, jnp.float32)
        rows_max.append(-fill)
        rows_min.append(fill)
    max_s[...] = jnp.maximum(max_s[...], jnp.concatenate(rows_max, axis=0))
    min_s[...] = jnp.minimum(min_s[...], jnp.concatenate(rows_min, axis=0))

    # ---- finalize: one full-block store per output at the last node step ----
    @pl.when(i == pl.num_programs(1) - 1)
    def _fin():
        cnt = cnt_ref[...]                     # [Bp, 1]
        has = cnt > 0.0
        mean_ref[...] = sum_s[...] / jnp.maximum(cnt, 1.0)   # empty graph -> 0
        max_ref[...] = jnp.where(has, max_s[...], 0.0)
        min_ref[...] = jnp.where(has, min_s[...], 0.0)


def _pick_feat_tile(f):
    # Leading "parallel" feature-chunk axis (v7x megacore; bounds vreg pressure
    # for large F). Single chunk when F is not a multiple of 128.
    for t in (512, 256, 128):
        if f % t == 0:
            return t
    return f


def multi_aggr(x, batch, num_graphs, *, node_tile=1024):
    """MultiAggr forward. x: [N, F] float, batch: [N] int graph ids in [0, B)."""
    N, F = x.shape

    # Node (reduction) tiling: big tiles amortize per-step overhead; clamp so
    # tiny inputs are not padded far past N.
    node_tile = min(_round_up(node_tile, 8), _round_up(max(N, 8), 8))
    n_pad = _round_up(N, node_tile)
    pad_n = n_pad - N

    b_pad = _round_up(max(num_graphs, 1), 8)
    feat_tile = _pick_feat_tile(F)
    n_feat = F // feat_tile
    n_node = n_pad // node_tile

    x_p = x.astype(jnp.float32)
    batch_i = batch.astype(jnp.int32)
    if pad_n:
        x_p = jnp.pad(x_p, ((0, pad_n), (0, 0)))
        batch_i = jnp.pad(batch_i, (0, pad_n), constant_values=-1)
    batch_col = batch_i[:, None]                                   # [n_pad, 1]

    # Per-graph node counts precomputed once host-side (removes a per-tile
    # lane reduction from the kernel).
    counts = jnp.zeros((b_pad,), jnp.float32).at[batch_i[:N]].add(1.0)[:, None]

    kernel = functools.partial(
        _multi_aggr_kernel, num_graphs=num_graphs, b_pad=b_pad)

    # Explicit VMEM budget: 2 pipeline buffers for x and the graph-id column
    # (lane-padded), plus tiny accumulators/outputs. Safe on v7x's 64 MiB.
    f_lane = _round_up(feat_tile, 128)
    vmem_est = (
        2 * node_tile * f_lane * 4            # x double buffer
        + 2 * node_tile * 128 * 4             # graph-id column (lane-padded)
        + 2 * b_pad * 128 * 4                 # counts
        + (3 * 2 + 3) * b_pad * f_lane * 4    # outputs (dbl-buffered) + scratch
    )
    vmem_limit = int(min(max(vmem_est + (4 << 20), 16 << 20), 56 << 20))

    mean, mx, mn = pl.pallas_call(
        kernel,
        out_shape=(
            jax.ShapeDtypeStruct((b_pad, F), jnp.float32),
            jax.ShapeDtypeStruct((b_pad, F), jnp.float32),
            jax.ShapeDtypeStruct((b_pad, F), jnp.float32),
        ),
        grid_spec=pltpu.PrefetchScalarGridSpec(
            num_scalar_prefetch=0,
            grid=(n_feat, n_node),                  # node (reduction) axis last
            in_specs=[
                pl.BlockSpec((b_pad, 1), lambda f, i: (0, 0)),              # counts
                pl.BlockSpec((node_tile, 1), lambda f, i: (i, 0)),          # graph ids
                pl.BlockSpec((node_tile, feat_tile), lambda f, i: (i, f)),  # features
            ],
            out_specs=(
                pl.BlockSpec((b_pad, feat_tile), lambda f, i: (0, f)),
                pl.BlockSpec((b_pad, feat_tile), lambda f, i: (0, f)),
                pl.BlockSpec((b_pad, feat_tile), lambda f, i: (0, f)),
            ),
            scratch_shapes=[
                pltpu.VMEM((b_pad, feat_tile), jnp.float32),   # sum
                pltpu.VMEM((b_pad, feat_tile), jnp.float32),   # max
                pltpu.VMEM((b_pad, feat_tile), jnp.float32),   # min
            ],
        ),
        compiler_params=pltpu.CompilerParams(
            dimension_semantics=("parallel", "arbitrary"),
            vmem_limit_bytes=vmem_limit,
        ),
    )(counts, batch_col, x_p)

    out = jnp.concatenate([mean, mx, mn], axis=1)   # [Bp, 3F]
    return out[:num_graphs]


def multi_aggr_ref(x, batch, num_graphs):
    """Pure-JAX reference (matches torch.cat([mean, max, min], dim=1))."""
    oh = (batch[None, :] == jnp.arange(num_graphs)[:, None]).astype(x.dtype)  # [B, N]
    cnt = oh.sum(axis=1, keepdims=True)
    mean = (oh @ x) / jnp.maximum(cnt, 1.0)
    mask = oh[:, :, None] > 0
    mx = jnp.where(mask, x[None], -jnp.inf).max(axis=1)
    mn = jnp.where(mask, x[None], jnp.inf).min(axis=1)
    has = cnt > 0
    return jnp.concatenate(
        [mean, jnp.where(has, mx, 0.0), jnp.where(has, mn, 0.0)], axis=1)


if __name__ == "__main__":
    N, F, B = 96, 32, 4     # 96 nodes, 32 features, 4 graphs

    key = jax.random.PRNGKey(0)
    kx, kb = jax.random.split(key)
    x = jax.random.normal(kx, (N, F), jnp.float32)
    batch = jax.random.randint(kb, (N,), 0, B, jnp.int32)   # unsorted assignment

    out = multi_aggr(x, batch, B)
    out = jax.block_until_ready(out)

    assert out.shape == (B, 3 * F)
    ref = multi_aggr_ref(x, batch, B)
    np.testing.assert_allclose(np.asarray(out), np.asarray(ref), rtol=1e-4, atol=1e-4)
    print("KERNEL_OK")
</pallas_src>

<mosaic_0001>
module attributes {stable_mosaic.version = 11 : i64} {
  func.func @_multi_aggr_kernel(%arg0: i32, %arg1: i32, %arg2: memref<8x1xf32, #tpu.memory_space<vmem>>, %arg3: memref<96x1xi32, #tpu.memory_space<vmem>>, %arg4: memref<96x32xf32, #tpu.memory_space<vmem>>, %arg5: memref<8x32xf32, #tpu.memory_space<vmem>>, %arg6: memref<8x32xf32, #tpu.memory_space<vmem>>, %arg7: memref<8x32xf32, #tpu.memory_space<vmem>>, %arg8: memref<8x32xf32, #tpu.memory_space<vmem>>, %arg9: memref<8x32xf32, #tpu.memory_space<vmem>>, %arg10: memref<8x32xf32, #tpu.memory_space<vmem>>) attributes {dimension_semantics = [#tpu.dimension_semantics<parallel>, #tpu.dimension_semantics<arbitrary>], iteration_bounds = array<i64: 1, 1>, scalar_prefetch = 0 : i64, scratch_operands = 3 : i64, tpu.core_type = #tpu.core_type<tc>, window_params = [{pipeline_mode = #tpu.pipeline_mode<synchronous>, transform_indices = @transform_0, window_bounds = array<i64: 8, 1>}, {transform_indices = @transform_1, window_bounds = array<i64: 96, 1>}, {transform_indices = @transform_2, window_bounds = array<i64: 96, 32>}, {transform_indices = @transform_3, window_bounds = array<i64: 8, 32>}, {transform_indices = @transform_4, window_bounds = array<i64: 8, 32>}, {transform_indices = @transform_5, window_bounds = array<i64: 8, 32>}]} {
    %c0_i32 = arith.constant 0 : i32
    %0 = arith.cmpi eq, %arg1, %c0_i32 : i32
    %1 = arith.extui %0 : i1 to i32
    %c0_i32_0 = arith.constant 0 : i32
    %2 = arith.cmpi ne, %1, %c0_i32_0 : i32
    scf.if %2 {
      %cst_37 = arith.constant 0.000000e+00 : f32
      %84 = vector.broadcast %cst_37 : f32 to vector<8x32xf32>
      %c0_38 = arith.constant 0 : index
      %c0_39 = arith.constant 0 : index
      %85 = vector.load %arg8[%c0_38, %c0_39] : memref<8x32xf32, #tpu.memory_space<vmem>>, vector<8x32xf32>
      tpu.vector_store %arg8[%c0_38, %c0_39], %84 {strides = array<i32>} : memref<8x32xf32, #tpu.memory_space<vmem>>, vector<8x32xf32>,
      %cst_40 = arith.constant 0xFF800000 : f32
      %86 = vector.broadcast %cst_40 : f32 to vector<8x32xf32>
      %c0_41 = arith.constant 0 : index
      %c0_42 = arith.constant 0 : index
      %87 = vector.load %arg9[%c0_41, %c0_42] : memref<8x32xf32, #tpu.memory_space<vmem>>, vector<8x32xf32>
      tpu.vector_store %arg9[%c0_41, %c0_42], %86 {strides = array<i32>} : memref<8x32xf32, #tpu.memory_space<vmem>>, vector<8x32xf32>,
      %cst_43 = arith.constant 0x7F800000 : f32
      %88 = vector.broadcast %cst_43 : f32 to vector<8x32xf32>
      %c0_44 = arith.constant 0 : index
      %c0_45 = arith.constant 0 : index
      %89 = vector.load %arg10[%c0_44, %c0_45] : memref<8x32xf32, #tpu.memory_space<vmem>>, vector<8x32xf32>
      tpu.vector_store %arg10[%c0_44, %c0_45], %88 {strides = array<i32>} : memref<8x32xf32, #tpu.memory_space<vmem>>, vector<8x32xf32>,
    } else {
    }
    %c0 = arith.constant 0 : index
    %c0_1 = arith.constant 0 : index
    %3 = vector.load %arg4[%c0, %c0_1] : memref<96x32xf32, #tpu.memory_space<vmem>>, vector<96x32xf32>
    %c0_2 = arith.constant 0 : index
    %c0_3 = arith.constant 0 : index
    %4 = vector.load %arg3[%c0_2, %c0_3] : memref<96x1xi32, #tpu.memory_space<vmem>>, vector<96x1xi32>
    %5 = tpu.iota {dimensions = array<i32: 1>} : vector<96x8xi32>
    %6 = vector.broadcast %4 : vector<96x1xi32> to vector<96x8xi32>
    %7 = arith.cmpi eq, %6, %5 : vector<96x8xi32>
    %8 = arith.extui %7 : vector<96x8xi1> to vector<96x8xi32>
    %9 = arith.sitofp %8 : vector<96x8xi32> to vector<96x8xf32>
    %c0_4 = arith.constant 0 : index
    %c0_5 = arith.constant 0 : index
    %10 = vector.load %arg8[%c0_4, %c0_5] : memref<8x32xf32, #tpu.memory_space<vmem>>, vector<8x32xf32>
    %cst = arith.constant dense<0.000000e+00> : vector<8x32xf32>
    %11 = tpu.matmul %9, %3, %cst {dimension_numbers = #tpu.dot_dimension_numbers<[0], [0], [1], [1], [0, 1, 1, 1], [], []>} : vector<96x8xf32>, vector<96x32xf32>, vector<8x32xf32> -> vector<8x32xf32>
    %12 = arith.addf %10, %11 : vector<8x32xf32>
    %c0_6 = arith.constant 0 : index
    %c0_7 = arith.constant 0 : index
    %13 = vector.load %arg8[%c0_6, %c0_7] : memref<8x32xf32, #tpu.memory_space<vmem>>, vector<8x32xf32>
    tpu.vector_store %arg8[%c0_6, %c0_7], %12 {strides = array<i32>} : memref<8x32xf32, #tpu.memory_space<vmem>>, vector<8x32xf32>,
    %c0_i32_8 = arith.constant 0 : i32
    %14 = vector.broadcast %c0_i32_8 : i32 to vector<96x1xi32>
    %15 = arith.cmpi eq, %4, %14 : vector<96x1xi32>
    %cst_9 = arith.constant 0xFF800000 : f32
    %16 = vector.shape_cast %15 : vector<96x1xi1> to vector<96x1xi1>
    %17 = vector.broadcast %16 : vector<96x1xi1> to vector<96x32xi1>
    %18 = vector.broadcast %cst_9 : f32 to vector<96x32xf32>
    %19 = arith.select %17, %3, %18 : vector<96x32xi1>, vector<96x32xf32>
    %cst_10 = arith.constant dense<0xFF800000> : vector<32xf32>
    %20 = vector.multi_reduction <maximumf>, %19, %cst_10 [0] : vector<96x32xf32> to vector<32xf32>
    %21 = vector.shape_cast %20 : vector<32xf32> to vector<1x32xf32>
    %cst_11 = arith.constant 0x7F800000 : f32
    %22 = vector.shape_cast %15 : vector<96x1xi1> to vector<96x1xi1>
    %23 = vector.broadcast %22 : vector<96x1xi1> to vector<96x32xi1>
    %24 = vector.broadcast %cst_11 : f32 to vector<96x32xf32>
    %25 = arith.select %23, %3, %24 : vector<96x32xi1>, vector<96x32xf32>
    %cst_12 = arith.constant dense<0x7F800000> : vector<32xf32>
    %26 = vector.multi_reduction <minimumf>, %25, %cst_12 [0] : vector<96x32xf32> to vector<32xf32>
    %27 = vector.shape_cast %26 : vector<32xf32> to vector<1x32xf32>
    %c1_i32 = arith.constant 1 : i32
    %28 = vector.broadcast %c1_i32 : i32 to vector<96x1xi32>
    %29 = arith.cmpi eq, %4, %28 : vector<96x1xi32>
    %cst_13 = arith.constant 0xFF800000 : f32
    %30 = vector.shape_cast %29 : vector<96x1xi1> to vector<96x1xi1>
    %31 = vector.broadcast %30 : vector<96x1xi1> to vector<96x32xi1>
    %32 = vector.broadcast %cst_13 : f32 to vector<96x32xf32>
    %33 = arith.select %31, %3, %32 : vector<96x32xi1>, vector<96x32xf32>
    %cst_14 = arith.constant dense<0xFF800000> : vector<32xf32>
    %34 = vector.multi_reduction <maximumf>, %33, %cst_14 [0] : vector<96x32xf32> to vector<32xf32>
    %35 = vector.shape_cast %34 : vector<32xf32> to vector<1x32xf32>
    %cst_15 = arith.constant 0x7F800000 : f32
    %36 = vector.shape_cast %29 : vector<96x1xi1> to vector<96x1xi1>
    %37 = vector.broadcast %36 : vector<96x1xi1> to vector<96x32xi1>
    %38 = vector.broadcast %cst_15 : f32 to vector<96x32xf32>
    %39 = arith.select %37, %3, %38 : vector<96x32xi1>, vector<96x32xf32>
    %cst_16 = arith.constant dense<0x7F800000> : vector<32xf32>
    %40 = vector.multi_reduction <minimumf>, %39, %cst_16 [0] : vector<96x32xf32> to vector<32xf32>
    %41 = vector.shape_cast %40 : vector<32xf32> to vector<1x32xf32>
    %c2_i32 = arith.constant 2 : i32
    %42 = vector.broadcast %c2_i32 : i32 to vector<96x1xi32>
    %43 = arith.cmpi eq, %4, %42 : vector<96x1xi32>
    %cst_17 = arith.constant 0xFF800000 : f32
    %44 = vector.shape_cast %43 : vector<96x1xi1> to vector<96x1xi1>
    %45 = vector.broadcast %44 : vector<96x1xi1> to vector<96x32xi1>
    %46 = vector.broadcast %cst_17 : f32 to vector<96x32xf32>
    %47 = arith.select %45, %3, %46 : vector<96x32xi1>, vector<96x32xf32>
    %cst_18 = arith.constant dense<0xFF800000> : vector<32xf32>
    %48 = vector.multi_reduction <maximumf>, %47, %cst_18 [0] : vector<96x32xf32> to vector<32xf32>
    %49 = vector.shape_cast %48 : vector<32xf32> to vector<1x32xf32>
    %cst_19 = arith.constant 0x7F800000 : f32
    %50 = vector.shape_cast %43 : vector<96x1xi1> to vector<96x1xi1>
    %51 = vector.broadcast %50 : vector<96x1xi1> to vector<96x32xi1>
    %52 = vector.broadcast %cst_19 : f32 to vector<96x32xf32>
    %53 = arith.select %51, %3, %52 : vector<96x32xi1>, vector<96x32xf32>
    %cst_20 = arith.constant dense<0x7F800000> : vector<32xf32>
    %54 = vector.multi_reduction <minimumf>, %53, %cst_20 [0] : vector<96x32xf32> to vector<32xf32>
    %55 = vector.shape_cast %54 : vector<32xf32> to vector<1x32xf32>
    %c3_i32 = arith.constant 3 : i32
    %56 = vector.broadcast %c3_i32 : i32 to vector<96x1xi32>
    %57 = arith.cmpi eq, %4, %56 : vector<96x1xi32>
    %cst_21 = arith.constant 0xFF800000 : f32
    %58 = vector.shape_cast %57 : vector<96x1xi1> to vector<96x1xi1>
    %59 = vector.broadcast %58 : vector<96x1xi1> to vector<96x32xi1>
    %60 = vector.broadcast %cst_21 : f32 to vector<96x32xf32>
    %61 = arith.select %59, %3, %60 : vector<96x32xi1>, vector<96x32xf32>
    %cst_22 = arith.constant dense<0xFF800000> : vector<32xf32>
    %62 = vector.multi_reduction <maximumf>, %61, %cst_22 [0] : vector<96x32xf32> to vector<32xf32>
    %63 = vector.shape_cast %62 : vector<32xf32> to vector<1x32xf32>
    %cst_23 = arith.constant 0x7F800000 : f32
    %64 = vector.shape_cast %57 : vector<96x1xi1> to vector<96x1xi1>
    %65 = vector.broadcast %64 : vector<96x1xi1> to vector<96x32xi1>
    %66 = vector.broadcast %cst_23 : f32 to vector<96x32xf32>
    %67 = arith.select %65, %3, %66 : vector<96x32xi1>, vector<96x32xf32>
    %cst_24 = arith.constant dense<0x7F800000> : vector<32xf32>
    %68 = vector.multi_reduction <minimumf>, %67, %cst_24 [0] : vector<96x32xf32> to vector<32xf32>
    %69 = vector.shape_cast %68 : vector<32xf32> to vector<1x32xf32>
    %cst_25 = arith.constant 0x7F800000 : f32
    %70 = vector.broadcast %cst_25 : f32 to vector<4x32xf32>
    %cst_26 = arith.constant 0.000000e+00 : f32
    %71 = vector.broadcast %cst_26 : f32 to vector<4x32xf32>
    %72 = arith.subf %71, %70 : vector<4x32xf32>
    %c0_27 = arith.constant 0 : index
    %c0_28 = arith.constant 0 : index
    %73 = vector.load %arg9[%c0_27, %c0_28] : memref<8x32xf32, #tpu.memory_space<vmem>>, vector<8x32xf32>
    %74 = tpu.concatenate %21, %35, %49, %63, %72 in 0 : vector<1x32xf32>, vector<1x32xf32>, vector<1x32xf32>, vector<1x32xf32>, vector<4x32xf32> -> vector<8x32xf32>
    %75 = arith.maximumf %73, %74 : vector<8x32xf32>
    %c0_29 = arith.constant 0 : index
    %c0_30 = arith.constant 0 : index
    %76 = vector.load %arg9[%c0_29, %c0_30] : memref<8x32xf32, #tpu.memory_space<vmem>>, vector<8x32xf32>
    tpu.vector_store %arg9[%c0_29, %c0_30], %75 {strides = array<i32>} : memref<8x32xf32, #tpu.memory_space<vmem>>, vector<8x32xf32>,
    %c0_31 = arith.constant 0 : index
    %c0_32 = arith.constant 0 : index
    %77 = vector.load %arg10[%c0_31, %c0_32] : memref<8x32xf32, #tpu.memory_space<vmem>>, vector<8x32xf32>
    %78 = tpu.concatenate %27, %41, %55, %69, %70 in 0 : vector<1x32xf32>, vector<1x32xf32>, vector<1x32xf32>, vector<1x32xf32>, vector<4x32xf32> -> vector<8x32xf32>
    %79 = arith.minimumf %77, %78 : vector<8x32xf32>
    %c0_33 = arith.constant 0 : index
    %c0_34 = arith.constant 0 : index
    %80 = vector.load %arg10[%c0_33, %c0_34] : memref<8x32xf32, #tpu.memory_space<vmem>>, vector<8x32xf32>
    tpu.vector_store %arg10[%c0_33, %c0_34], %79 {strides = array<i32>} : memref<8x32xf32, #tpu.memory_space<vmem>>, vector<8x32xf32>,
    %c0_i32_35 = arith.constant 0 : i32
    %81 = arith.cmpi eq, %arg1, %c0_i32_35 : i32
    %82 = arith.extui %81 : i1 to i32
    %c0_i32_36 = arith.constant 0 : i32
    %83 = arith.cmpi ne, %82, %c0_i32_36 : i32
    scf.if %83 {
      %c0_37 = arith.constant 0 : index
      %c0_38 = arith.constant 0 : index
      %84 = vector.load %arg2[%c0_37, %c0_38] : memref<8x1xf32, #tpu.memory_space<vmem>>, vector<8x1xf32>
      %cst_39 = arith.constant 0.000000e+00 : f32
      %85 = vector.broadcast %cst_39 : f32 to vector<8x1xf32>
      %86 = arith.cmpf ogt, %84, %85 : vector<8x1xf32>
      %c0_40 = arith.constant 0 : index
      %c0_41 = arith.constant 0 : index
      %87 = vector.load %arg8[%c0_40, %c0_41] : memref<8x32xf32, #tpu.memory_space<vmem>>, vector<8x32xf32>
      %cst_42 = arith.constant 1.000000e+00 : f32
      %88 = vector.broadcast %cst_42 : f32 to vector<8x1xf32>
      %89 = arith.maximumf %84, %88 : vector<8x1xf32>
      %90 = vector.broadcast %89 : vector<8x1xf32> to vector<8x32xf32>
      %91 = arith.divf %87, %90 : vector<8x32xf32>
      %c0_43 = arith.constant 0 : index
      %c0_44 = arith.constant 0 : index
      %92 = vector.load %arg5[%c0_43, %c0_44] : memref<8x32xf32, #tpu.memory_space<vmem>>, vector<8x32xf32>
      tpu.vector_store %arg5[%c0_43, %c0_44], %91 {strides = array<i32>} : memref<8x32xf32, #tpu.memory_space<vmem>>, vector<8x32xf32>,
      %c0_45 = arith.constant 0 : index
      %c0_46 = arith.constant 0 : index
      %93 = vector.load %arg9[%c0_45, %c0_46] : memref<8x32xf32, #tpu.memory_space<vmem>>, vector<8x32xf32>
      %cst_47 = arith.constant 0.000000e+00 : f32
      %94 = vector.shape_cast %86 : vector<8x1xi1> to vector<8x1xi1>
      %95 = vector.broadcast %94 : vector<8x1xi1> to vector<8x32xi1>
      %96 = vector.broadcast %cst_47 : f32 to vector<8x32xf32>
      %97 = arith.select %95, %93, %96 : vector<8x32xi1>, vector<8x32xf32>
      %c0_48 = arith.constant 0 : index
      %c0_49 = arith.constant 0 : index
      %98 = vector.load %arg6[%c0_48, %c0_49] : memref<8x32xf32, #tpu.memory_space<vmem>>, vector<8x32xf32>
      tpu.vector_store %arg6[%c0_48, %c0_49], %97 {strides = array<i32>} : memref<8x32xf32, #tpu.memory_space<vmem>>, vector<8x32xf32>,
      %c0_50 = arith.constant 0 : index
      %c0_51 = arith.constant 0 : index
      %99 = vector.load %arg10[%c0_50, %c0_51] : memref<8x32xf32, #tpu.memory_space<vmem>>, vector<8x32xf32>
      %cst_52 = arith.constant 0.000000e+00 : f32
      %100 = vector.shape_cast %86 : vector<8x1xi1> to vector<8x1xi1>
      %101 = vector.broadcast %100 : vector<8x1xi1> to vector<8x32xi1>
      %102 = vector.broadcast %cst_52 : f32 to vector<8x32xf32>
      %103 = arith.select %101, %99, %102 : vector<8x32xi1>, vector<8x32xf32>
      %c0_53 = arith.constant 0 : index
      %c0_54 = arith.constant 0 : index
      %104 = vector.load %arg7[%c0_53, %c0_54] : memref<8x32xf32, #tpu.memory_space<vmem>>, vector<8x32xf32>
      tpu.vector_store %arg7[%c0_53, %c0_54], %103 {strides = array<i32>} : memref<8x32xf32, #tpu.memory_space<vmem>>, vector<8x32xf32>,
    } else {
    }
    return
  }
  func.func @transform_0(%arg0: i32, %arg1: i32) -> (i32, i32) {
    %c0_i32 = arith.constant 0 : i32
    %c0_i32_0 = arith.constant 0 : i32
    %c0_i32_1 = arith.constant 0 : i32
    return %c0_i32, %c0_i32_0 : i32, i32
  }
  func.func @transform_1(%arg0: i32, %arg1: i32) -> (i32, i32) {
    %c0_i32 = arith.constant 0 : i32
    %c0_i32_0 = arith.constant 0 : i32
    return %arg1, %c0_i32 : i32, i32
  }
  func.func @transform_2(%arg0: i32, %arg1: i32) -> (i32, i32) {
    %c0_i32 = arith.constant 0 : i32
    return %arg1, %arg0 : i32, i32
  }
  func.func @transform_3(%arg0: i32, %arg1: i32) -> (i32, i32) {
    %c0_i32 = arith.constant 0 : i32
    %c0_i32_0 = arith.constant 0 : i32
    return %c0_i32, %arg0 : i32, i32
  }
  func.func @transform_4(%arg0: i32, %arg1: i32) -> (i32, i32) {
    %c0_i32 = arith.constant 0 : i32
    %c0_i32_0 = arith.constant 0 : i32
    return %c0_i32, %arg0 : i32, i32
  }
  func.func @transform_5(%arg0: i32, %arg1: i32) -> (i32, i32) {
    %c0_i32 = arith.constant 0 : i32
    %c0_i32_0 = arith.constant 0 : i32
    return %c0_i32, %arg0 : i32, i32
  }
}

</mosaic_0001>

<llo_original>
// kernel: tpu_custom_call.1
$region0: #{tpu_custom_call.1}
  #allocation0 [shape = 'u32[]', space=smem, size = 0x4, offset = 0x4, fixed_abs, tag = 'smem constant byte address 0x4 - core index']
  #allocation1 [shape = 'u32[144,128]{1,0:T(1,128)}', space=vmem, size = 0x12000, scoped, tag = 'internal scratch']
  #allocation2 [shape = 'f32[8,32]{1,0:T(8,128)}', space=vmem, size = 0x1000, scoped, tag = 'scratch operand']
  #allocation3 [shape = 'f32[8,32]{1,0:T(8,128)}', space=vmem, size = 0x1000, scoped, tag = 'scratch operand']
  #allocation4 [shape = 'f32[8,32]{1,0:T(8,128)}', space=vmem, size = 0x1000, scoped, tag = 'scratch operand']
  %s0 = inlined_call_operand.vmem [shape: f32[8,1], index: 0, kind: input, shape index: {}]
  %s1 = inlined_call_operand.vmem [shape: s32[96,1], index: 1, kind: input, shape index: {}]
  %s2 = inlined_call_operand.vmem [shape: f32[96,32], index: 2, kind: input, shape index: {}]
  %s3 = inlined_call_operand.hbm [shape: f32[8,32], index: 3, kind: output, shape index: {0}]
  %s4 = inlined_call_operand.hbm [shape: f32[8,32], index: 4, kind: output, shape index: {1}]
  %s5 = inlined_call_operand.hbm [shape: f32[8,32], index: 5, kind: output, shape index: {2}]
  %6 = xla_tuple %s3, %s4, %s5
  %s7 = sld [smem:[#allocation0]]
  $region46: #{tpu_custom_call.1} parent=0
    _
  %s9 = ssub.s32 1, %s7
  %s10 = scalar_select 0, %s9, %s7
  $region1: #{tpu_custom_call.1} parent=0
    #allocation5 [shape = 'u8[4096]{0}', space=vmem, size = 0x1000, scoped, tag = 'output window, operand 0, single buffered']
    #allocation6 [shape = 's32[1]{0}', space=sflag, size = 0x4, scoped, tag = 'scoped memory for tpu_custom_call.1']
    #allocation7 [shape = 'u8[4096]{0}', space=vmem, size = 0x1000, scoped, tag = 'output window, operand 1, single buffered']
    #allocation8 [shape = 's32[1]{0}', space=sflag, size = 0x4, scoped, tag = 'scoped memory for tpu_custom_call.1']
    #allocation9 [shape = 'u8[4096]{0}', space=vmem, size = 0x1000, scoped, tag = 'output window, operand 2, single buffered']
    %11 = vsyncpa [#allocation6], 0
    %12 = vsyncpa [#allocation8], 0
    // Predicated region
    $region2: #{tpu_custom_call.1} parent=1 // pred_check
      _
    $region3: #{tpu_custom_call.1} parent=1 // pred_check_branch
      %14 = sbr.rel (0) target = $region5
    $region4: #{tpu_custom_call.1} parent=1 // pred_region
      _
    $region5: #{tpu_custom_call.1} parent=1 // pred_fallthru
      _
    // Predicated region
    $region6: #{tpu_custom_call.1} parent=1 // pred_check
      _
    $region7: #{tpu_custom_call.1} parent=1 // pred_check_branch
      %16 = sbr.rel (0) target = $region9
    $region8: #{tpu_custom_call.1} parent=1 // pred_region
      _
    $region9: #{tpu_custom_call.1} parent=1 // pred_fallthru
      _
    // Predicated region
    $region10: #{tpu_custom_call.1} parent=1 // pred_check
      _
    $region11: #{tpu_custom_call.1} parent=1 // pred_check_branch
      %18 = sbr.rel (0) target = $region13
    $region12: #{tpu_custom_call.1} parent=1 // pred_region
      _
    $region13: #{tpu_custom_call.1} parent=1 // pred_fallthru
      _
    %p19 = scmp.eq.s32.totalorder 0, 0
    // Predicated region
    $region14: #{tpu_custom_call.1} parent=1 // pred_check
      %p20 = pneg %p19
    $region15: #{tpu_custom_call.1} parent=1 // pred_check_branch
      %22 = sbr.rel (%p20) target = $region17
    $region16: #{tpu_custom_call.1} parent=1 // pred_region
      %vm23 = vcmask 261120
      %24 = vst.msk [vmem:[#allocation2] sm:$0xff] %vm23, 0.0
      %25 = vst.msk [vmem:[#allocation3] sm:$0xff] %vm23, -inf
      %26 = vst.msk [vmem:[#allocation4] sm:$0xff] %vm23, inf
    $region17: #{tpu_custom_call.1} parent=1 // pred_fallthru
      _
    %v27 = vld [vmem:[%s2] sm:$0xff]
    %v28 = vld [vmem:[%s2 + $0x8] sm:$0xff]
    %v29 = vld [vmem:[%s2 + $0x10] sm:$0xff]
    %v30 = vld [vmem:[%s2 + $0x18] sm:$0xff]
    %v31 = vld [vmem:[%s2 + $0x20] sm:$0xff]
    %v32 = vld [vmem:[%s2 + $0x28] sm:$0xff]
    %v33 = vld [vmem:[%s2 + $0x30] sm:$0xff]
    %v34 = vld [vmem:[%s2 + $0x38] sm:$0xff]
    %v35 = vld [vmem:[%s2 + $0x40] sm:$0xff]
    %v36 = vld [vmem:[%s2 + $0x48] sm:$0xff]
    %v37 = vld [vmem:[%s2 + $0x50] sm:$0xff]
    %v38 = vld [vmem:[%s2 + $0x58] sm:$0xff]
    %v39 = vld [vmem:[%s1] sm:$0xff]
    %v40 = vld [vmem:[%s1 + $0x8] sm:$0xff]
    %v41 = vld [vmem:[%s1 + $0x10] sm:$0xff]
    %v42 = vld [vmem:[%s1 + $0x18] sm:$0xff]
    %v43 = vld [vmem:[%s1 + $0x20] sm:$0xff]
    %v44 = vld [vmem:[%s1 + $0x28] sm:$0xff]
    %v45 = vld [vmem:[%s1 + $0x30] sm:$0xff]
    %v46 = vld [vmem:[%s1 + $0x38] sm:$0xff]
    %v47 = vld [vmem:[%s1 + $0x40] sm:$0xff]
    %v48 = vld [vmem:[%s1 + $0x48] sm:$0xff]
    %v49 = vld [vmem:[%s1 + $0x50] sm:$0xff]
    %v50 = vld [vmem:[%s1 + $0x58] sm:$0xff]
    %v51 = vlaneseq
    %v52 = vand.u32 %v51, 127
    %53 = vset.pattern.permute.xlu0 0
    %54 = vperm.xlu0 %53, %v39
    %v55 = vpop.permute.xlu0 %54
    %56 = vset.pattern.permute.xlu0 0
    %57 = vperm.xlu0 %56, %v40
    %v58 = vpop.permute.xlu0 %57
    %59 = vset.pattern.permute.xlu0 0
    %60 = vperm.xlu0 %59, %v41
    %v61 = vpop.permute.xlu0 %60
    %62 = vset.pattern.permute.xlu0 0
    %63 = vperm.xlu0 %62, %v42
    %v64 = vpop.permute.xlu0 %63
    %65 = vset.pattern.permute.xlu0 0
    %66 = vperm.xlu0 %65, %v43
    %v67 = vpop.permute.xlu0 %66
    %68 = vset.pattern.permute.xlu0 0
    %69 = vperm.xlu0 %68, %v44
    %v70 = vpop.permute.xlu0 %69
    %71 = vset.pattern.permute.xlu0 0
    %72 = vperm.xlu0 %71, %v45
    %v73 = vpop.permute.xlu0 %72
    %74 = vset.pattern.permute.xlu0 0
    %75 = vperm.xlu0 %74, %v46
    %v76 = vpop.permute.xlu0 %75
    %77 = vset.pattern.permute.xlu0 0
    %78 = vperm.xlu0 %77, %v47
    %v79 = vpop.permute.xlu0 %78
    %80 = vset.pattern.permute.xlu0 0
    %81 = vperm.xlu0 %80, %v48
    %v82 = vpop.permute.xlu0 %81
    %83 = vset.pattern.permute.xlu0 0
    %84 = vperm.xlu0 %83, %v49
    %v85 = vpop.permute.xlu0 %84
    %86 = vset.pattern.permute.xlu0 0
    %87 = vperm.xlu0 %86, %v50
    %v88 = vpop.permute.xlu0 %87
    %vm89 = vcmp.eq.s32.totalorder %v55, %v52
    %vm90 = vcmp.eq.s32.totalorder %v58, %v52
    %vm91 = vcmp.eq.s32.totalorder %v61, %v52
    %vm92 = vcmp.eq.s32.totalorder %v64, %v52
    %vm93 = vcmp.eq.s32.totalorder %v67, %v52
    %vm94 = vcmp.eq.s32.totalorder %v70, %v52
    %vm95 = vcmp.eq.s32.totalorder %v73, %v52
    %vm96 = vcmp.eq.s32.totalorder %v76, %v52
    %vm97 = vcmp.eq.s32.totalorder %v79, %v52
    %vm98 = vcmp.eq.s32.totalorder %v82, %v52
    %vm99 = vcmp.eq.s32.totalorder %v85, %v52
    %vm100 = vcmp.eq.s32.totalorder %v88, %v52
    %v101 = vsel %vm89, 1, 0
    %v102 = vsel %vm90, 1, 0
    %v103 = vsel %vm91, 1, 0
    %v104 = vsel %vm92, 1, 0
    %v105 = vsel %vm93, 1, 0
    %v106 = vsel %vm94, 1, 0
    %v107 = vsel %vm95, 1, 0
    %v108 = vsel %vm96, 1, 0
    %v109 = vsel %vm97, 1, 0
    %v110 = vsel %vm98, 1, 0
    %v111 = vsel %vm99, 1, 0
    %v112 = vsel %vm100, 1, 0
    %v113 = vcvt.s32.f32 %v101
    %v114 = vcvt.s32.f32 %v102
    %v115 = vcvt.s32.f32 %v103
    %v116 = vcvt.s32.f32 %v104
    %v117 = vcvt.s32.f32 %v105
    %v118 = vcvt.s32.f32 %v106
    %v119 = vcvt.s32.f32 %v107
    %v120 = vcvt.s32.f32 %v108
    %v121 = vcvt.s32.f32 %v109
    %v122 = vcvt.s32.f32 %v110
    %v123 = vcvt.s32.f32 %v111
    %v124 = vcvt.s32.f32 %v112
    %v125 = vld [vmem:[#allocation2] sm:$0xff]
    %126 = vxpose.xlu0.b32.start [1/16] %v113, 128
    %127 = vxpose.xlu0.b32.cont [2/16] %v114, 128
    %128 = vxpose.xlu0.b32.cont [3/16] %v115, 128
    %129 = vxpose.xlu0.b32.cont [4/16] %v116, 128
    %130 = vxpose.xlu0.b32.cont [5/16] %v117, 128
    %131 = vxpose.xlu0.b32.cont [6/16] %v118, 128
    %132 = vxpose.xlu0.b32.cont [7/16] %v119, 128
    %133 = vxpose.xlu0.b32.cont [8/16] %v120, 128
    %134 = vxpose.xlu0.b32.cont [9/16] %v121, 128
    %135 = vxpose.xlu0.b32.cont [10/16] %v122, 128
    %136 = vxpose.xlu0.b32.cont [11/16] %v123, 128
    %137 = vxpose.xlu0.b32.cont [12/16] %v124, 128
    %138 = vxpose.xlu0.b32.cont [13/16] 0.0, 128
    %139 = vxpose.xlu0.b32.cont [14/16] 0.0, 128
    %140 = vxpose.xlu0.b32.cont [15/16] 0.0, 128
    %141 = vxpose.xlu0.b32.end [16/16] 0.0, 128
    %v142 = vpop.trf.xlu0
    %v143 = vpop.trf.xlu0
    %v144 = vpop.trf.xlu0
    %v145 = vpop.trf.xlu0
    %v146 = vpop.trf.xlu0
    %v147 = vpop.trf.xlu0
    %v148 = vpop.trf.xlu0
    %v149 = vpop.trf.xlu0
    %v150 = vpop.trf.xlu0
    %v151 = vpop.trf.xlu0
    %v152 = vpop.trf.xlu0
    %v153 = vpop.trf.xlu0
    %v154 = vpop.trf.xlu0
    %v155 = vpop.trf.xlu0
    %v156 = vpop.trf.xlu0
    %v157 = vpop.trf.xlu0
    %vm158 = vcmask 785408
    %v160 = vsel %vm158, %v142, 0
    %162 = vmatprep.subr.mxu0 0.0
    %163 = vmatpush1.msra.mxu0 %v27
    %164 = vmatprep.subr.mxu0 0.0
    %165 = vmatpush1.msra.mxu0 %v28
    %166 = vmatprep.subr.mxu0 0.0
    %167 = vmatpush1.msra.mxu0 %v29
    %168 = vmatprep.subr.mxu0 0.0
    %169 = vmatpush1.msra.mxu0 %v30
    %170 = vmatprep.subr.mxu0 0.0
    %171 = vmatpush1.msra.mxu0 %v31
    %172 = vmatprep.subr.mxu0 0.0
    %173 = vmatpush1.msra.mxu0 %v32
    %174 = vmatprep.subr.mxu0 0.0
    %175 = vmatpush1.msra.mxu0 %v33
    %176 = vmatprep.subr.mxu0 0.0
    %177 = vmatpush1.msra.mxu0 %v34
    %178 = vmatprep.subr.mxu0 0.0
    %179 = vmatpush1.msra.mxu0 %v35
    %180 = vmatprep.subr.mxu0 0.0
    %181 = vmatpush1.msra.mxu0 %v36
    %182 = vmatprep.subr.mxu0 0.0
    %183 = vmatpush1.msra.mxu0 %v37
    %184 = vmatprep.subr.mxu0 0.0
    %185 = vmatpush1.msra.mxu0 %v38
    %186 = vmatprep.subr.mxu0 0.0
    %187 = vmatpush1.msra.mxu0 0.0
    %188 = vmatprep.subr.mxu0 0.0
    %189 = vmatpush1.msra.mxu0 0.0
    %190 = vmatprep.subr.mxu0 0.0
    %191 = vmatpush1.msra.mxu0 0.0
    %192 = vmatprep.subr.mxu0 0.0
    %193 = vmatpush1.msra.mxu0 0.0
    %194 = vmatprep.subr.mxu0 0.0
    %195 = vmatpush1.msra.mxu0 0.0
    %196 = vmatprep.subr.mxu0 0.0
    %197 = vmatpush1.msra.mxu0 0.0
    %198 = vmatprep.subr.mxu0 0.0
    %199 = vmatpush1.msra.mxu0 0.0
    %200 = vmatprep.subr.mxu0 0.0
    %201 = vmatpush1.msra.mxu0 0.0
    %202 = vmatprep.subr.mxu0 0.0
    %203 = vmatpush1.msra.mxu0 0.0
    %204 = vmatprep.subr.mxu0 0.0
    %205 = vmatpush1.msra.mxu0 0.0
    %206 = vmatprep.subr.mxu0 0.0
    %207 = vmatpush1.msra.mxu0 0.0
    %208 = vmatprep.subr.mxu0 0.0
    %209 = vmatpush1.msra.mxu0 0.0
    %210 = vmatprep.subr.mxu0 0.0
    %211 = vmatpush1.msra.mxu0 0.0
    %212 = vmatprep.subr.mxu0 0.0
    %213 = vmatpush1.msra.mxu0 0.0
    %214 = vmatprep.subr.mxu0 0.0
    %215 = vmatpush1.msra.mxu0 0.0
    %216 = vmatprep.subr.mxu0 0.0
    %217 = vmatpush1.msra.mxu0 0.0
    %218 = vmatprep.subr.mxu0 0.0
    %219 = vmatpush1.msra.mxu0 0.0
    %220 = vmatprep.subr.mxu0 0.0
    %221 = vmatpush1.msra.mxu0 0.0
    %222 = vmatprep.subr.mxu0 0.0
    %223 = vmatpush1.msra.mxu0 0.0
    %224 = vmatprep.subr.mxu0 0.0
    %225 = vmatpush1.msra.mxu0 0.0
    %226 = vmatprep.mubr.f32.mxu0 0.0
    %227 = vmatmul.mubr.f32.gmra.mrb[0].mxu0 %v160
    %v228 = vpop.f32.mrb[0].mxu0
    %v229 = vadd.f32 0.0, %v228
    %v230 = vpop.f32.mrb[0].mxu0
    %231 = vdwg.mxu0
    %v232 = vadd.f32 %v125, %v229
    %vm233 = vcmask 261120
    %234 = vst.msk [vmem:[#allocation2] sm:$0xff] %vm233, %v232
    %vm235 = vcmp.eq.s32.totalorder %v39, 0
    %vm236 = vcmp.eq.s32.totalorder %v40, 0
    %vm237 = vcmp.eq.s32.totalorder %v41, 0
    %vm238 = vcmp.eq.s32.totalorder %v42, 0
    %vm239 = vcmp.eq.s32.totalorder %v43, 0
    %vm240 = vcmp.eq.s32.totalorder %v44, 0
    %vm241 = vcmp.eq.s32.totalorder %v45, 0
    %vm242 = vcmp.eq.s32.totalorder %v46, 0
    %vm243 = vcmp.eq.s32.totalorder %v47, 0
    %vm244 = vcmp.eq.s32.totalorder %v48, 0
    %vm245 = vcmp.eq.s32.totalorder %v49, 0
    %vm246 = vcmp.eq.s32.totalorder %v50, 0
    %v247 = vsel %vm235, 1, 0
    %v248 = vsel %vm236, 1, 0
    %v249 = vsel %vm237, 1, 0
    %v250 = vsel %vm238, 1, 0
    %v251 = vsel %vm239, 1, 0
    %v252 = vsel %vm240, 1, 0
    %v253 = vsel %vm241, 1, 0
    %v254 = vsel %vm242, 1, 0
    %v255 = vsel %vm243, 1, 0
    %v256 = vsel %vm244, 1, 0
    %v257 = vsel %vm245, 1, 0
    %v258 = vsel %vm246, 1, 0
    %259 = vset.pattern.permute.xlu0 0
    %260 = vperm.xlu0 %259, %v247
    %v261 = vpop.permute.xlu0 %260
    %262 = vset.pattern.permute.xlu0 0
    %263 = vperm.xlu0 %262, %v248
    %v264 = vpop.permute.xlu0 %263
    %265 = vset.pattern.permute.xlu0 0
    %266 = vperm.xlu0 %265, %v249
    %v267 = vpop.permute.xlu0 %266
    %268 = vset.pattern.permute.xlu0 0
    %269 = vperm.xlu0 %268, %v250
    %v270 = vpop.permute.xlu0 %269
    %271 = vset.pattern.permute.xlu0 0
    %272 = vperm.xlu0 %271, %v251
    %v273 = vpop.permute.xlu0 %272
    %274 = vset.pattern.permute.xlu0 0
    %275 = vperm.xlu0 %274, %v252
    %v276 = vpop.permute.xlu0 %275
    %277 = vset.pattern.permute.xlu0 0
    %278 = vperm.xlu0 %277, %v253
    %v279 = vpop.permute.xlu0 %278
    %280 = vset.pattern.permute.xlu0 0
    %281 = vperm.xlu0 %280, %v254
    %v282 = vpop.permute.xlu0 %281
    %283 = vset.pattern.permute.xlu0 0
    %284 = vperm.xlu0 %283, %v255
    %v285 = vpop.permute.xlu0 %284
    %286 = vset.pattern.permute.xlu0 0
    %287 = vperm.xlu0 %286, %v256
    %v288 = vpop.permute.xlu0 %287
    %289 = vset.pattern.permute.xlu0 0
    %290 = vperm.xlu0 %289, %v257
    %v291 = vpop.permute.xlu0 %290
    %292 = vset.pattern.permute.xlu0 0
    %293 = vperm.xlu0 %292, %v258
    %v294 = vpop.permute.xlu0 %293
    %vm295 = vcmp.eq.s32.totalorder %v261, 1
    %vm296 = vcmp.eq.s32.totalorder %v264, 1
    %vm297 = vcmp.eq.s32.totalorder %v267, 1
    %vm298 = vcmp.eq.s32.totalorder %v270, 1
    %vm299 = vcmp.eq.s32.totalorder %v273, 1
    %vm300 = vcmp.eq.s32.totalorder %v276, 1
    %vm301 = vcmp.eq.s32.totalorder %v279, 1
    %vm302 = vcmp.eq.s32.totalorder %v282, 1
    %vm303 = vcmp.eq.s32.totalorder %v285, 1
    %vm304 = vcmp.eq.s32.totalorder %v288, 1
    %vm305 = vcmp.eq.s32.totalorder %v291, 1
    %vm306 = vcmp.eq.s32.totalorder %v294, 1
    %v307 = vsel %vm295, %v27, -inf
    %v308 = vsel %vm296, %v28, -inf
    %v309 = vsel %vm297, %v29, -inf
    %v310 = vsel %vm298, %v30, -inf
    %v311 = vsel %vm299, %v31, -inf
    %v312 = vsel %vm300, %v32, -inf
    %v313 = vsel %vm301, %v33, -inf
    %v314 = vsel %vm302, %v34, -inf
    %v315 = vsel %vm303, %v35, -inf
    %v316 = vsel %vm304, %v36, -inf
    %v317 = vsel %vm305, %v37, -inf
    %v318 = vsel %vm306, %v38, -inf
    %v319 = vsel %vm233, %v307, -inf
    %v320 = vsel %vm233, %v308, -inf
    %v321 = vsel %vm233, %v309, -inf
    %v322 = vsel %vm233, %v310, -inf
    %v323 = vsel %vm233, %v311, -inf
    %v324 = vmax.f32 %v319, %v323
    %v325 = vsel %vm233, %v312, -inf
    %v326 = vmax.f32 %v320, %v325
    %v327 = vsel %vm233, %v313, -inf
    %v328 = vmax.f32 %v321, %v327
    %v329 = vsel %vm233, %v314, -inf
    %v330 = vmax.f32 %v322, %v329
    %v331 = vsel %vm233, %v315, -inf
    %v332 = vmax.f32 %v324, %v331
    %v333 = vsel %vm233, %v316, -inf
    %v334 = vmax.f32 %v326, %v333
    %v335 = vsel %vm233, %v317, -inf
    %v336 = vmax.f32 %v328, %v335
    %v337 = vsel %vm233, %v318, -inf
    %v338 = vmax.f32 %v330, %v337
    %v339 = vmax.f32 %v332, %v334
    %v340 = vmax.f32 %v336, %v338
    %v341 = vmax.f32 %v339, %v340
    %v342 = vrot.slane %v341, 4
    %v343 = vmax.f32 %v341, %v342
    %v344 = vrot.slane %v343, 2
    %v345 = vmax.f32 %v343, %v344
    %v346 = vrot.slane %v345, 1
    %v347 = vmax.f32 %v345, %v346
    %v348 = vsel %vm295, %v27, inf
    %v349 = vsel %vm296, %v28, inf
    %v350 = vsel %vm297, %v29, inf
    %v351 = vsel %vm298, %v30, inf
    %v352 = vsel %vm299, %v31, inf
    %v353 = vsel %vm300, %v32, inf
    %v354 = vsel %vm301, %v33, inf
    %v355 = vsel %vm302, %v34, inf
    %v356 = vsel %vm303, %v35, inf
    %v357 = vsel %vm304, %v36, inf
    %v358 = vsel %vm305, %v37, inf
    %v359 = vsel %vm306, %v38, inf
    %v360 = vsel %vm233, %v348, inf
    %v361 = vsel %vm233, %v349, inf
    %v362 = vsel %vm233, %v350, inf
    %v363 = vsel %vm233, %v351, inf
    %v364 = vsel %vm233, %v352, inf
    %v365 = vmin.f32 %v360, %v364
    %v366 = vsel %vm233, %v353, inf
    %v367 = vmin.f32 %v361, %v366
    %v368 = vsel %vm233, %v354, inf
    %v369 = vmin.f32 %v362, %v368
    %v370 = vsel %vm233, %v355, inf
    %v371 = vmin.f32 %v363, %v370
    %v372 = vsel %vm233, %v356, inf
    %v373 = vmin.f32 %v365, %v372
    %v374 = vsel %vm233, %v357, inf
    %v375 = vmin.f32 %v367, %v374
    %v376 = vsel %vm233, %v358, inf
    %v377 = vmin.f32 %v369, %v376
    %v378 = vsel %vm233, %v359, inf
    %v379 = vmin.f32 %v371, %v378
    %v380 = vmin.f32 %v373, %v375
    %v381 = vmin.f32 %v377, %v379
    %v382 = vmin.f32 %v380, %v381
    %v383 = vrot.slane %v382, 4
    %v384 = vmin.f32 %v382, %v383
    %v385 = vrot.slane %v384, 2
    %v386 = vmin.f32 %v384, %v385
    %v387 = vrot.slane %v386, 1
    %v388 = vmin.f32 %v386, %v387
    %vm389 = vcmp.eq.s32.totalorder %v39, 1
    %vm390 = vcmp.eq.s32.totalorder %v40, 1
    %vm391 = vcmp.eq.s32.totalorder %v41, 1
    %vm392 = vcmp.eq.s32.totalorder %v42, 1
    %vm393 = vcmp.eq.s32.totalorder %v43, 1
    %vm394 = vcmp.eq.s32.totalorder %v44, 1
    %vm395 = vcmp.eq.s32.totalorder %v45, 1
    %vm396 = vcmp.eq.s32.totalorder %v46, 1
    %vm397 = vcmp.eq.s32.totalorder %v47, 1
    %vm398 = vcmp.eq.s32.totalorder %v48, 1
    %vm399 = vcmp.eq.s32.totalorder %v49, 1
    %vm400 = vcmp.eq.s32.totalorder %v50, 1
    %v401 = vsel %vm389, 1, 0
    %v402 = vsel %vm390, 1, 0
    %v403 = vsel %vm391, 1, 0
    %v404 = vsel %vm392, 1, 0
    %v405 = vsel %vm393, 1, 0
    %v406 = vsel %vm394, 1, 0
    %v407 = vsel %vm395, 1, 0
    %v408 = vsel %vm396, 1, 0
    %v409 = vsel %vm397, 1, 0
    %v410 = vsel %vm398, 1, 0
    %v411 = vsel %vm399, 1, 0
    %v412 = vsel %vm400, 1, 0
    %413 = vset.pattern.permute.xlu0 0
    %414 = vperm.xlu0 %413, %v401
    %v415 = vpop.permute.xlu0 %414
    %416 = vset.pattern.permute.xlu0 0
    %417 = vperm.xlu0 %416, %v402
    %v418 = vpop.permute.xlu0 %417
    %419 = vset.pattern.permute.xlu0 0
    %420 = vperm.xlu0 %419, %v403
    %v421 = vpop.permute.xlu0 %420
    %422 = vset.pattern.permute.xlu0 0
    %423 = vperm.xlu0 %422, %v404
    %v424 = vpop.permute.xlu0 %423
    %425 = vset.pattern.permute.xlu0 0
    %426 = vperm.xlu0 %425, %v405
    %v427 = vpop.permute.xlu0 %426
    %428 = vset.pattern.permute.xlu0 0
    %429 = vperm.xlu0 %428, %v406
    %v430 = vpop.permute.xlu0 %429
    %431 = vset.pattern.permute.xlu0 0
    %432 = vperm.xlu0 %431, %v407
    %v433 = vpop.permute.xlu0 %432
    %434 = vset.pattern.permute.xlu0 0
    %435 = vperm.xlu0 %434, %v408
    %v436 = vpop.permute.xlu0 %435
    %437 = vset.pattern.permute.xlu0 0
    %438 = vperm.xlu0 %437, %v409
    %v439 = vpop.permute.xlu0 %438
    %440 = vset.pattern.permute.xlu0 0
    %441 = vperm.xlu0 %440, %v410
    %v442 = vpop.permute.xlu0 %441
    %443 = vset.pattern.permute.xlu0 0
    %444 = vperm.xlu0 %443, %v411
    %v445 = vpop.permute.xlu0 %444
    %446 = vset.pattern.permute.xlu0 0
    %447 = vperm.xlu0 %446, %v412
    %v448 = vpop.permute.xlu0 %447
    %vm449 = vcmp.eq.s32.totalorder %v415, 1
    %vm450 = vcmp.eq.s32.totalorder %v418, 1
    %vm451 = vcmp.eq.s32.totalorder %v421, 1
    %vm452 = vcmp.eq.s32.totalorder %v424, 1
    %vm453 = vcmp.eq.s32.totalorder %v427, 1
    %vm454 = vcmp.eq.s32.totalorder %v430, 1
    %vm455 = vcmp.eq.s32.totalorder %v433, 1
    %vm456 = vcmp.eq.s32.totalorder %v436, 1
    %vm457 = vcmp.eq.s32.totalorder %v439, 1
    %vm458 = vcmp.eq.s32.totalorder %v442, 1
    %vm459 = vcmp.eq.s32.totalorder %v445, 1
    %vm460 = vcmp.eq.s32.totalorder %v448, 1
    %v461 = vsel %vm449, %v27, -inf
    %v462 = vsel %vm450, %v28, -inf
    %v463 = vsel %vm451, %v29, -inf
    %v464 = vsel %vm452, %v30, -inf
    %v465 = vsel %vm453, %v31, -inf
    %v466 = vsel %vm454, %v32, -inf
    %v467 = vsel %vm455, %v33, -inf
    %v468 = vsel %vm456, %v34, -inf
    %v469 = vsel %vm457, %v35, -inf
    %v470 = vsel %vm458, %v36, -inf
    %v471 = vsel %vm459, %v37, -inf
    %v472 = vsel %vm460, %v38, -inf
    %v473 = vsel %vm233, %v461, -inf
    %v474 = vsel %vm233, %v462, -inf
    %v475 = vsel %vm233, %v463, -inf
    %v476 = vsel %vm233, %v464, -inf
    %v477 = vsel %vm233, %v465, -inf
    %v478 = vmax.f32 %v473, %v477
    %v479 = vsel %vm233, %v466, -inf
    %v480 = vmax.f32 %v474, %v479
    %v481 = vsel %vm233, %v467, -inf
    %v482 = vmax.f32 %v475, %v481
    %v483 = vsel %vm233, %v468, -inf
    %v484 = vmax.f32 %v476, %v483
    %v485 = vsel %vm233, %v469, -inf
    %v486 = vmax.f32 %v478, %v485
    %v487 = vsel %vm233, %v470, -inf
    %v488 = vmax.f32 %v480, %v487
    %v489 = vsel %vm233, %v471, -inf
    %v490 = vmax.f32 %v482, %v489
    %v491 = vsel %vm233, %v472, -inf
    %v492 = vmax.f32 %v484, %v491
    %v493 = vmax.f32 %v486, %v488
    %v494 = vmax.f32 %v490, %v492
    %v495 = vmax.f32 %v493, %v494
    %v496 = vrot.slane %v495, 4
    %v497 = vmax.f32 %v495, %v496
    %v498 = vrot.slane %v497, 2
    %v499 = vmax.f32 %v497, %v498
    %v500 = vrot.slane %v499, 1
    %v501 = vmax.f32 %v499, %v500
    %v502 = vsel %vm449, %v27, inf
    %v503 = vsel %vm450, %v28, inf
    %v504 = vsel %vm451, %v29, inf
    %v505 = vsel %vm452, %v30, inf
    %v506 = vsel %vm453, %v31, inf
    %v507 = vsel %vm454, %v32, inf
    %v508 = vsel %vm455, %v33, inf
    %v509 = vsel %vm456, %v34, inf
    %v510 = vsel %vm457, %v35, inf
    %v511 = vsel %vm458, %v36, inf
    %v512 = vsel %vm459, %v37, inf
    %v513 = vsel %vm460, %v38, inf
    %v514 = vsel %vm233, %v502, inf
    %v515 = vsel %vm233, %v503, inf
    %v516 = vsel %vm233, %v504, inf
    %v517 = vsel %vm233, %v505, inf
    %v518 = vsel %vm233, %v506, inf
    %v519 = vmin.f32 %v514, %v518
    %v520 = vsel %vm233, %v507, inf
    %v521 = vmin.f32 %v515, %v520
    %v522 = vsel %vm233, %v508, inf
    %v523 = vmin.f32 %v516, %v522
    %v524 = vsel %vm233, %v509, inf
    %v525 = vmin.f32 %v517, %v524
    %v526 = vsel %vm233, %v510, inf
    %v527 = vmin.f32 %v519, %v526
    %v528 = vsel %vm233, %v511, inf
    %v529 = vmin.f32 %v521, %v528
    %v530 = vsel %vm233, %v512, inf
    %v531 = vmin.f32 %v523, %v530
    %v532 = vsel %vm233, %v513, inf
    %v533 = vmin.f32 %v525, %v532
    %v534 = vmin.f32 %v527, %v529
    %v535 = vmin.f32 %v531, %v533
    %v536 = vmin.f32 %v534, %v535
    %v537 = vrot.slane %v536, 4
    %v538 = vmin.f32 %v536, %v537
    %v539 = vrot.slane %v538, 2
    %v540 = vmin.f32 %v538, %v539
    %v541 = vrot.slane %v540, 1
    %v542 = vmin.f32 %v540, %v541
    %vm543 = vcmp.eq.s32.totalorder %v39, 2
    %vm544 = vcmp.eq.s32.totalorder %v40, 2
    %vm545 = vcmp.eq.s32.totalorder %v41, 2
    %vm546 = vcmp.eq.s32.totalorder %v42, 2
    %vm547 = vcmp.eq.s32.totalorder %v43, 2
    %vm548 = vcmp.eq.s32.totalorder %v44, 2
    %vm549 = vcmp.eq.s32.totalorder %v45, 2
    %vm550 = vcmp.eq.s32.totalorder %v46, 2
    %vm551 = vcmp.eq.s32.totalorder %v47, 2
    %vm552 = vcmp.eq.s32.totalorder %v48, 2
    %vm553 = vcmp.eq.s32.totalorder %v49, 2
    %vm554 = vcmp.eq.s32.totalorder %v50, 2
    %v555 = vsel %vm543, 1, 0
    %v556 = vsel %vm544, 1, 0
    %v557 = vsel %vm545, 1, 0
    %v558 = vsel %vm546, 1, 0
    %v559 = vsel %vm547, 1, 0
    %v560 = vsel %vm548, 1, 0
    %v561 = vsel %vm549, 1, 0
    %v562 = vsel %vm550, 1, 0
    %v563 = vsel %vm551, 1, 0
    %v564 = vsel %vm552, 1, 0
    %v565 = vsel %vm553, 1, 0
    %v566 = vsel %vm554, 1, 0
    %567 = vset.pattern.permute.xlu0 0
    %568 = vperm.xlu0 %567, %v555
    %v569 = vpop.permute.xlu0 %568
    %570 = vset.pattern.permute.xlu0 0
    %571 = vperm.xlu0 %570, %v556
    %v572 = vpop.permute.xlu0 %571
    %573 = vset.pattern.permute.xlu0 0
    %574 = vperm.xlu0 %573, %v557
    %v575 = vpop.permute.xlu0 %574
    %576 = vset.pattern.permute.xlu0 0
    %577 = vperm.xlu0 %576, %v558
    %v578 = vpop.permute.xlu0 %577
    %579 = vset.pattern.permute.xlu0 0
    %580 = vperm.xlu0 %579, %v559
    %v581 = vpop.permute.xlu0 %580
    %582 = vset.pattern.permute.xlu0 0
    %583 = vperm.xlu0 %582, %v560
    %v584 = vpop.permute.xlu0 %583
    %585 = vset.pattern.permute.xlu0 0
    %586 = vperm.xlu0 %585, %v561
    %v587 = vpop.permute.xlu0 %586
    %588 = vset.pattern.permute.xlu0 0
    %589 = vperm.xlu0 %588, %v562
    %v590 = vpop.permute.xlu0 %589
    %591 = vset.pattern.permute.xlu0 0
    %592 = vperm.xlu0 %591, %v563
    %v593 = vpop.permute.xlu0 %592
    %594 = vset.pattern.permute.xlu0 0
    %595 = vperm.xlu0 %594, %v564
    %v596 = vpop.permute.xlu0 %595
    %597 = vset.pattern.permute.xlu0 0
    %598 = vperm.xlu0 %597, %v565
    %v599 = vpop.permute.xlu0 %598
    %600 = vset.pattern.permute.xlu0 0
    %601 = vperm.xlu0 %600, %v566
    %v602 = vpop.permute.xlu0 %601
    %vm603 = vcmp.eq.s32.totalorder %v569, 1
    %vm604 = vcmp.eq.s32.totalorder %v572, 1
    %vm605 = vcmp.eq.s32.totalorder %v575, 1
    %vm606 = vcmp.eq.s32.totalorder %v578, 1
    %vm607 = vcmp.eq.s32.totalorder %v581, 1
    %vm608 = vcmp.eq.s32.totalorder %v584, 1
    %vm609 = vcmp.eq.s32.totalorder %v587, 1
    %vm610 = vcmp.eq.s32.totalorder %v590, 1
    %vm611 = vcmp.eq.s32.totalorder %v593, 1
    %vm612 = vcmp.eq.s32.totalorder %v596, 1
    %vm613 = vcmp.eq.s32.totalorder %v599, 1
    %vm614 = vcmp.eq.s32.totalorder %v602, 1
    %v615 = vsel %vm603, %v27, -inf
    %v616 = vsel %vm604, %v28, -inf
    %v617 = vsel %vm605, %v29, -inf
    %v618 = vsel %vm606, %v30, -inf
    %v619 = vsel %vm607, %v31, -inf
    %v620 = vsel %vm608, %v32, -inf
    %v621 = vsel %vm609, %v33, -inf
    %v622 = vsel %vm610, %v34, -inf
    %v623 = vsel %vm611, %v35, -inf
    %v624 = vsel %vm612, %v36, -inf
    %v625 = vsel %vm613, %v37, -inf
    %v626 = vsel %vm614, %v38, -inf
    %v627 = vsel %vm233, %v615, -inf
    %v628 = vsel %vm233, %v616, -inf
    %v629 = vsel %vm233, %v617, -inf
    %v630 = vsel %vm233, %v618, -inf
    %v631 = vsel %vm233, %v619, -inf
    %v632 = vmax.f32 %v627, %v631
    %v633 = vsel %vm233, %v620, -inf
    %v634 = vmax.f32 %v628, %v633
    %v635 = vsel %vm233, %v621, -inf
    %v636 = vmax.f32 %v629, %v635
    %v637 = vsel %vm233, %v622, -inf
    %v638 = vmax.f32 %v630, %v637
    %v639 = vsel %vm233, %v623, -inf
    %v640 = vmax.f32 %v632, %v639
    %v641 = vsel %vm233, %v624, -inf
    %v642 = vmax.f32 %v634, %v641
    %v643 = vsel %vm233, %v625, -inf
    %v644 = vmax.f32 %v636, %v643
    %v645 = vsel %vm233, %v626, -inf
    %v646 = vmax.f32 %v638, %v645
    %v647 = vmax.f32 %v640, %v642
    %v648 = vmax.f32 %v644, %v646
    %v649 = vmax.f32 %v647, %v648
    %v650 = vrot.slane %v649, 4
    %v651 = vmax.f32 %v649, %v650
    %v652 = vrot.slane %v651, 2
    %v653 = vmax.f32 %v651, %v652
    %v654 = vrot.slane %v653, 1
    %v655 = vmax.f32 %v653, %v654
    %v656 = vsel %vm603, %v27, inf
    %v657 = vsel %vm604, %v28, inf
    %v658 = vsel %vm605, %v29, inf
    %v659 = vsel %vm606, %v30, inf
    %v660 = vsel %vm607, %v31, inf
    %v661 = vsel %vm608, %v32, inf
    %v662 = vsel %vm609, %v33, inf
    %v663 = vsel %vm610, %v34, inf
    %v664 = vsel %vm611, %v35, inf
    %v665 = vsel %vm612, %v36, inf
    %v666 = vsel %vm613, %v37, inf
    %v667 = vsel %vm614, %v38, inf
    %v668 = vsel %vm233, %v656, inf
    %v669 = vsel %vm233, %v657, inf
    %v670 = vsel %vm233, %v658, inf
    %v671 = vsel %vm233, %v659, inf
    %v672 = vsel %vm233, %v660, inf
    %v673 = vmin.f32 %v668, %v672
    %v674 = vsel %vm233, %v661, inf
    %v675 = vmin.f32 %v669, %v674
    %v676 = vsel %vm233, %v662, inf
    %v677 = vmin.f32 %v670, %v676
    %v678 = vsel %vm233, %v663, inf
    %v679 = vmin.f32 %v671, %v678
    %v680 = vsel %vm233, %v664, inf
    %v681 = vmin.f32 %v673, %v680
    %v682 = vsel %vm233, %v665, inf
    %v683 = vmin.f32 %v675, %v682
    %v684 = vsel %vm233, %v666, inf
    %v685 = vmin.f32 %v677, %v684
    %v686 = vsel %vm233, %v667, inf
    %v687 = vmin.f32 %v679, %v686
    %v688 = vmin.f32 %v681, %v683
    %v689 = vmin.f32 %v685, %v687
    %v690 = vmin.f32 %v688, %v689
    %v691 = vrot.slane %v690, 4
    %v692 = vmin.f32 %v690, %v691
    %v693 = vrot.slane %v692, 2
    %v694 = vmin.f32 %v692, %v693
    %v695 = vrot.slane %v694, 1
    %v696 = vmin.f32 %v694, %v695
    %vm697 = vcmp.eq.s32.totalorder %v39, 3
    %vm698 = vcmp.eq.s32.totalorder %v40, 3
    %vm699 = vcmp.eq.s32.totalorder %v41, 3
    %vm700 = vcmp.eq.s32.totalorder %v42, 3
    %vm701 = vcmp.eq.s32.totalorder %v43, 3
    %vm702 = vcmp.eq.s32.totalorder %v44, 3
    %vm703 = vcmp.eq.s32.totalorder %v45, 3
    %vm704 = vcmp.eq.s32.totalorder %v46, 3
    %vm705 = vcmp.eq.s32.totalorder %v47, 3
    %vm706 = vcmp.eq.s32.totalorder %v48, 3
    %vm707 = vcmp.eq.s32.totalorder %v49, 3
    %vm708 = vcmp.eq.s32.totalorder %v50, 3
    %v709 = vsel %vm697, 1, 0
    %v710 = vsel %vm698, 1, 0
    %v711 = vsel %vm699, 1, 0
    %v712 = vsel %vm700, 1, 0
    %v713 = vsel %vm701, 1, 0
    %v714 = vsel %vm702, 1, 0
    %v715 = vsel %vm703, 1, 0
    %v716 = vsel %vm704, 1, 0
    %v717 = vsel %vm705, 1, 0
    %v718 = vsel %vm706, 1, 0
    %v719 = vsel %vm707, 1, 0
    %v720 = vsel %vm708, 1, 0
    %721 = vset.pattern.permute.xlu0 0
    %722 = vperm.xlu0 %721, %v709
    %v723 = vpop.permute.xlu0 %722
    %724 = vset.pattern.permute.xlu0 0
    %725 = vperm.xlu0 %724, %v710
    %v726 = vpop.permute.xlu0 %725
    %727 = vset.pattern.permute.xlu0 0
    %728 = vperm.xlu0 %727, %v711
    %v729 = vpop.permute.xlu0 %728
    %730 = vset.pattern.permute.xlu0 0
    %731 = vperm.xlu0 %730, %v712
    %v732 = vpop.permute.xlu0 %731
    %733 = vset.pattern.permute.xlu0 0
    %734 = vperm.xlu0 %733, %v713
    %v735 = vpop.permute.xlu0 %734
    %736 = vset.pattern.permute.xlu0 0
    %737 = vperm.xlu0 %736, %v714
    %v738 = vpop.permute.xlu0 %737
    %739 = vset.pattern.permute.xlu0 0
    %740 = vperm.xlu0 %739, %v715
    %v741 = vpop.permute.xlu0 %740
    %742 = vset.pattern.permute.xlu0 0
    %743 = vperm.xlu0 %742, %v716
    %v744 = vpop.permute.xlu0 %743
    %745 = vset.pattern.permute.xlu0 0
    %746 = vperm.xlu0 %745, %v717
    %v747 = vpop.permute.xlu0 %746
    %748 = vset.pattern.permute.xlu0 0
    %749 = vperm.xlu0 %748, %v718
    %v750 = vpop.permute.xlu0 %749
    %751 = vset.pattern.permute.xlu0 0
    %752 = vperm.xlu0 %751, %v719
    %v753 = vpop.permute.xlu0 %752
    %754 = vset.pattern.permute.xlu0 0
    %755 = vperm.xlu0 %754, %v720
    %v756 = vpop.permute.xlu0 %755
    %vm757 = vcmp.eq.s32.totalorder %v723, 1
    %vm758 = vcmp.eq.s32.totalorder %v726, 1
    %vm759 = vcmp.eq.s32.totalorder %v729, 1
    %vm760 = vcmp.eq.s32.totalorder %v732, 1
    %vm761 = vcmp.eq.s32.totalorder %v735, 1
    %vm762 = vcmp.eq.s32.totalorder %v738, 1
    %vm763 = vcmp.eq.s32.totalorder %v741, 1
    %vm764 = vcmp.eq.s32.totalorder %v744, 1
    %vm765 = vcmp.eq.s32.totalorder %v747, 1
    %vm766 = vcmp.eq.s32.totalorder %v750, 1
    %vm767 = vcmp.eq.s32.totalorder %v753, 1
    %vm768 = vcmp.eq.s32.totalorder %v756, 1
    %v769 = vsel %vm757, %v27, -inf
    %v770 = vsel %vm758, %v28, -inf
    %v771 = vsel %vm759, %v29, -inf
    %v772 = vsel %vm760, %v30, -inf
    %v773 = vsel %vm761, %v31, -inf
    %v774 = vsel %vm762, %v32, -inf
    %v775 = vsel %vm763, %v33, -inf
    %v776 = vsel %vm764, %v34, -inf
    %v777 = vsel %vm765, %v35, -inf
    %v778 = vsel %vm766, %v36, -inf
    %v779 = vsel %vm767, %v37, -inf
    %v780 = vsel %vm768, %v38, -inf
    %v781 = vsel %vm233, %v769, -inf
    %v782 = vsel %vm233, %v770, -inf
    %v783 = vsel %vm233, %v771, -inf
    %v784 = vsel %vm233, %v772, -inf
    %v785 = vsel %vm233, %v773, -inf
    %v786 = vmax.f32 %v781, %v785
    %v787 = vsel %vm233, %v774, -inf
    %v788 = vmax.f32 %v782, %v787
    %v789 = vsel %vm233, %v775, -inf
    %v790 = vmax.f32 %v783, %v789
    %v791 = vsel %vm233, %v776, -inf
    %v792 = vmax.f32 %v784, %v791
    %v793 = vsel %vm233, %v777, -inf
    %v794 = vmax.f32 %v786, %v793
    %v795 = vsel %vm233, %v778, -inf
    %v796 = vmax.f32 %v788, %v795
    %v797 = vsel %vm233, %v779, -inf
    %v798 = vmax.f32 %v790, %v797
    %v799 = vsel %vm233, %v780, -inf
    %v800 = vmax.f32 %v792, %v799
    %v801 = vmax.f32 %v794, %v796
    %v802 = vmax.f32 %v798, %v800
    %v803 = vmax.f32 %v801, %v802
    %v804 = vrot.slane %v803, 4
    %v805 = vmax.f32 %v803, %v804
    %v806 = vrot.slane %v805, 2
    %v807 = vmax.f32 %v805, %v806
    %v808 = vrot.slane %v807, 1
    %v809 = vmax.f32 %v807, %v808
    %v810 = vsel %vm757, %v27, inf
    %v811 = vsel %vm758, %v28, inf
    %v812 = vsel %vm759, %v29, inf
    %v813 = vsel %vm760, %v30, inf
    %v814 = vsel %vm761, %v31, inf
    %v815 = vsel %vm762, %v32, inf
    %v816 = vsel %vm763, %v33, inf
    %v817 = vsel %vm764, %v34, inf
    %v818 = vsel %vm765, %v35, inf
    %v819 = vsel %vm766, %v36, inf
    %v820 = vsel %vm767, %v37, inf
    %v821 = vsel %vm768, %v38, inf
    %v822 = vsel %vm233, %v810, inf
    %v823 = vsel %vm233, %v811, inf
    %v824 = vsel %vm233, %v812, inf
    %v825 = vsel %vm233, %v813, inf
    %v826 = vsel %vm233, %v814, inf
    %v827 = vmin.f32 %v822, %v826
    %v828 = vsel %vm233, %v815, inf
    %v829 = vmin.f32 %v823, %v828
    %v830 = vsel %vm233, %v816, inf
    %v831 = vmin.f32 %v824, %v830
    %v832 = vsel %vm233, %v817, inf
    %v833 = vmin.f32 %v825, %v832
    %v834 = vsel %vm233, %v818, inf
    %v835 = vmin.f32 %v827, %v834
    %v836 = vsel %vm233, %v819, inf
    %v837 = vmin.f32 %v829, %v836
    %v838 = vsel %vm233, %v820, inf
    %v839 = vmin.f32 %v831, %v838
    %v840 = vsel %vm233, %v821, inf
    %v841 = vmin.f32 %v833, %v840
    %v842 = vmin.f32 %v835, %v837
    %v843 = vmin.f32 %v839, %v841
    %v844 = vmin.f32 %v842, %v843
    %v845 = vrot.slane %v844, 4
    %v846 = vmin.f32 %v844, %v845
    %v847 = vrot.slane %v846, 2
    %v848 = vmin.f32 %v846, %v847
    %v849 = vrot.slane %v848, 1
    %v850 = vmin.f32 %v848, %v849
    %v851 = vld [vmem:[#allocation3] sm:$0xff]
    %vm852 = vcmask 1040384
    %v853 = vsel %vm852, %v347, %v501
    %vm854 = vcmask 1041408
    %v855 = vsel %vm854, %v853, %v655
    %vm856 = vcmask 1042432
    %v857 = vsel %vm856, %v855, %v809
    %vm858 = vcmask 1043456
    %v859 = vsel %vm858, %v857, -inf
    %v860 = vmax.f32 %v851, %v859
    %861 = vst.msk [vmem:[#allocation3] sm:$0xff] %vm233, %v860
    %v862 = vld [vmem:[#allocation4] sm:$0xff]
    %v863 = vsel %vm852, %v388, %v542
    %v864 = vsel %vm854, %v863, %v696
    %v865 = vsel %vm856, %v864, %v850
    %v866 = vsel %vm858, %v865, inf
    %v867 = vmin.f32 %v862, %v866
    %868 = vst.msk [vmem:[#allocation4] sm:$0xff] %vm233, %v867
    // Predicated region
    $region18: #{tpu_custom_call.1} parent=1 // pred_check
      %p869 = pneg %p19
    $region19: #{tpu_custom_call.1} parent=1 // pred_check_branch
      %871 = sbr.rel (%p869) target = $region21
    $region20: #{tpu_custom_call.1} parent=1 // pred_region
      %v872 = vld [vmem:[%s0] sm:$0xff]
      %vm873 = vcmp.gt.f32.partialorder %v872, 0.0
      %v874 = vld [vmem:[#allocation2] sm:$0xff]
      %v875 = vmax.f32 %v872, 1.0
      %877 = vset.pattern.permute.xlu0 0
      %878 = vperm.xlu0 %877, %v875
      %v879 = vpop.permute.xlu0 %878
      %v881 = vrcp.pop %v879
      %v882 = vmul.f32 %v874, %v881
      %883 = vst.msk [vmem:[#allocation5] sm:$0xff] %vm233, %v882
      %v884 = vld [vmem:[#allocation3] sm:$0xff]
      %v885 = vsel %vm873, 1, 0
      %886 = vset.pattern.permute.xlu0 0
      %887 = vperm.xlu0 %886, %v885
      %v888 = vpop.permute.xlu0 %887
      %vm889 = vcmp.eq.s32.totalorder %v888, 1
      %v890 = vsel %vm889, %v884, 0.0
      %891 = vst.msk [vmem:[#allocation7] sm:$0xff] %vm233, %v890
      %v892 = vld [vmem:[#allocation4] sm:$0xff]
      %v893 = vsel %vm889, %v892, 0.0
      %894 = vst.msk [vmem:[#allocation9] sm:$0xff] %vm233, %v893
    $region21: #{tpu_custom_call.1} parent=1 // pred_fallthru
      _
    // Predicated region
    $region22: #{tpu_custom_call.1} parent=1 // pred_check
      _
    $region23: #{tpu_custom_call.1} parent=1 // pred_check_branch
      %896 = sbr.rel (0) target = $region25
    $region24: #{tpu_custom_call.1} parent=1 // pred_region
      %s898 = ssub.s32 128, 128
      %899 = vsyncadd [#allocation6], %s898
      %s901 = sshll.u32 [#allocation5], 4
      %s902 = int_to_ptr.vmem [resolvable:$true] %s901
      %904 = dma.vmem_to_hbm [thread:$0]  %s902, 128, %s3, [#allocation6]
    $region25: #{tpu_custom_call.1} parent=1 // pred_fallthru
      _
    // Predicated region
    $region26: #{tpu_custom_call.1} parent=1 // pred_check
      _
    $region27: #{tpu_custom_call.1} parent=1 // pred_check_branch
      %906 = sbr.rel (0) target = $region29
    $region28: #{tpu_custom_call.1} parent=1 // pred_region
      %s908 = ssub.s32 128, 128
      %909 = vsyncadd [#allocation8], %s908
      %s911 = sshll.u32 [#allocation7], 4
      %s912 = int_to_ptr.vmem [resolvable:$true] %s911
      %914 = dma.vmem_to_hbm [thread:$0]  %s912, 128, %s4, [#allocation8]
    $region29: #{tpu_custom_call.1} parent=1 // pred_fallthru
      _
    // Predicated region
    $region30: #{tpu_custom_call.1} parent=1 // pred_check
      _
    $region31: #{tpu_custom_call.1} parent=1 // pred_check_branch
      %916 = sbr.rel (0) target = $region33
    $region32: #{tpu_custom_call.1} parent=1 // pred_region
      %s918 = ssub.s32 128, 128
      %919 = vsyncadd [#allocation8], %s918
      %s921 = sshll.u32 [#allocation9], 4
      %s922 = int_to_ptr.vmem [resolvable:$true] %s921
      %924 = dma.vmem_to_hbm [thread:$0]  %s922, 128, %s5, [#allocation8]
    $region33: #{tpu_custom_call.1} parent=1 // pred_fallthru
      _
    // Predicated region
    $region34: #{tpu_custom_call.1} parent=1 // pred_check
      _
    $region35: #{tpu_custom_call.1} parent=1 // pred_check_branch
      %926 = sbr.rel (0) target = $region37
    $region36: #{tpu_custom_call.1} parent=1 // pred_region
      %927 = dma.done [#allocation6], 128
    $region37: #{tpu_custom_call.1} parent=1 // pred_fallthru
      _
    // Predicated region
    $region38: #{tpu_custom_call.1} parent=1 // pred_check
      _
    $region39: #{tpu_custom_call.1} parent=1 // pred_check_branch
      %929 = sbr.rel (0) target = $region41
    $region40: #{tpu_custom_call.1} parent=1 // pred_region
      %930 = dma.done [#allocation8], 128
    $region41: #{tpu_custom_call.1} parent=1 // pred_fallthru
      _
    // Predicated region
    $region42: #{tpu_custom_call.1} parent=1 // pred_check
      _
    $region43: #{tpu_custom_call.1} parent=1 // pred_check_branch
      %932 = sbr.rel (0) target = $region45
    $region44: #{tpu_custom_call.1} parent=1 // pred_region
      %933 = dma.done [#allocation8], 128
    $region45: #{tpu_custom_call.1} parent=1 // pred_fallthru
      _
    %934 = vsyncpa [#allocation6], 1
    %935 = vsyncpa [#allocation8], 1

</llo_original>
